<compile_context>
chip_gen: v7x
topology: tpu7x:2x2x1
jax: 0.10.0
libtpu: 0.0.40
codegen_flags: <defaults>
</compile_context>

<pallas_src>
import functools

import jax
import jax.numpy as jnp
from jax.experimental import pallas as pl
from jax.experimental.pallas import tpu as pltpu

HIDDEN = 128
LANE = 128
SUBLANE = 8


def _round_up(n, m):
    return ((n + m - 1) // m) * m


def _pad_axis(a, axis, target):
    pad = target - a.shape[axis]
    if pad <= 0:
        return a
    widths = [(0, 0)] * a.ndim
    widths[axis] = (0, pad)
    return jnp.pad(a, widths)


def mlp_kernel(x_ref, w1_ref, b1_ref, w2_ref, b2_ref, w3_ref, b3_ref, o_ref):
    # fc1: bf16 MXU inputs, f32 accumulate; bias/ReLU in f32.
    h1 = jnp.dot(x_ref[...], w1_ref[...], preferred_element_type=jnp.float32)
    h1 = jnp.maximum(h1 + b1_ref[...], 0.0)
    # fc2
    h2 = jnp.dot(h1.astype(jnp.bfloat16), w2_ref[...],
                 preferred_element_type=jnp.float32)
    h2 = jnp.maximum(h2 + b2_ref[...], 0.0)
    # fc3 (no activation)
    out = jnp.dot(h2.astype(jnp.bfloat16), w3_ref[...],
                  preferred_element_type=jnp.float32)
    o_ref[...] = out + b3_ref[...]


def init_params(key, input_dim, action_dim, hidden=HIDDEN):
    """Deterministic init mimicking nn.Linear's U(-1/sqrt(fan_in), 1/sqrt(fan_in))."""
    ks = jax.random.split(key, 6)

    def lin(kw, kb, fan_in, fan_out):
        bound = 1.0 / jnp.sqrt(jnp.float32(fan_in))
        w = jax.random.uniform(kw, (fan_in, fan_out), jnp.float32, -bound, bound)
        b = jax.random.uniform(kb, (1, fan_out), jnp.float32, -bound, bound)
        return w, b

    w1, b1 = lin(ks[0], ks[1], input_dim, hidden)
    w2, b2 = lin(ks[2], ks[3], hidden, hidden)
    w3, b3 = lin(ks[4], ks[5], hidden, action_dim)
    return {"w1": w1, "b1": b1, "w2": w2, "b2": b2, "w3": w3, "b3": b3}


def prepare_params(params):
    """One-time padding + bf16 cast of the raw f32 Linear params (kernel layout)."""
    in_dim = params["w1"].shape[0]
    act_dim = params["w3"].shape[1]
    in_pad = _round_up(in_dim, LANE)
    out_pad = _round_up(act_dim, LANE)
    return {
        # zero-padded extra rows of w1 / cols of w3 keep the math exact
        "w1": _pad_axis(params["w1"], 0, in_pad).astype(jnp.bfloat16),
        "b1": params["b1"].reshape(1, -1).astype(jnp.float32),
        "w2": params["w2"].astype(jnp.bfloat16),
        "b2": params["b2"].reshape(1, -1).astype(jnp.float32),
        "w3": _pad_axis(params["w3"], 1, out_pad).astype(jnp.bfloat16),
        "b3": _pad_axis(params["b3"].reshape(1, -1), 1, out_pad).astype(jnp.float32),
        "in_dim": in_dim,
        "act_dim": act_dim,
    }


def sudoku_agent_forward(x, prepared, *, block_b=256):
    """x: [B, input_dim] float32. prepared: output of prepare_params()."""
    B, in_dim = x.shape
    in_pad = prepared["w1"].shape[0]
    out_pad = prepared["w3"].shape[1]
    act_dim = prepared["act_dim"]
    assert in_dim == prepared["in_dim"]

    # Batch tile: at least sublane-aligned, at most block_b; pad B up to a multiple.
    tb = min(block_b, _round_up(B, SUBLANE))
    pb = _round_up(B, tb)
    num_tiles = pb // tb

    # Zero-pad x to (pb, in_pad) and cast MXU input to bf16 once, in the wrapper.
    xp = jnp.zeros((pb, in_pad), jnp.bfloat16).at[:B, :in_dim].set(
        x.astype(jnp.bfloat16))

    out = pl.pallas_call(
        mlp_kernel,
        out_shape=jax.ShapeDtypeStruct((pb, out_pad), jnp.float32),
        grid=(num_tiles,),
        in_specs=[
            pl.BlockSpec((tb, in_pad), lambda i: (i, 0)),          # x tile
            pl.BlockSpec((in_pad, HIDDEN), lambda i: (0, 0)),      # w1 (resident)
            pl.BlockSpec((1, HIDDEN), lambda i: (0, 0)),           # b1
            pl.BlockSpec((HIDDEN, HIDDEN), lambda i: (0, 0)),      # w2
            pl.BlockSpec((1, HIDDEN), lambda i: (0, 0)),           # b2
            pl.BlockSpec((HIDDEN, out_pad), lambda i: (0, 0)),     # w3
            pl.BlockSpec((1, out_pad), lambda i: (0, 0)),          # b3
        ],
        out_specs=pl.BlockSpec((tb, out_pad), lambda i: (i, 0)),
        compiler_params=pltpu.CompilerParams(
            dimension_semantics=("parallel",)),
    )(xp, prepared["w1"], prepared["b1"], prepared["w2"], prepared["b2"],
      prepared["w3"], prepared["b3"])

    # Slice back to the logical (un-padded) shape.
    return out[:B, :act_dim]


def reference_forward_bf16(x, p):
    """Pure-jnp reference with the same bf16-input / f32-accumulate recipe."""
    bf = jnp.bfloat16
    h = jnp.dot(x.astype(bf), p["w1"].astype(bf),
                preferred_element_type=jnp.float32) + p["b1"]
    h = jnp.maximum(h, 0.0)
    h = jnp.dot(h.astype(bf), p["w2"].astype(bf),
                preferred_element_type=jnp.float32) + p["b2"]
    h = jnp.maximum(h, 0.0)
    return jnp.dot(h.astype(bf), p["w3"].astype(bf),
                   preferred_element_type=jnp.float32) + p["b3"]


if __name__ == "__main__":
    # Sudoku: 9x9 = 81 flattened cells in, 9x9x9 = 729 actions out.
    INPUT_DIM, ACTION_DIM = 81, 729

    key = jax.random.PRNGKey(0)
    kx1, kx2, kp = jax.random.split(key, 3)
    params = init_params(kp, INPUT_DIM, ACTION_DIM)
    prepared = prepare_params(params)

    # Case 1: small batch (single grid step, tb = 8).
    x1 = jax.random.uniform(kx1, (8, INPUT_DIM), jnp.float32, 0.0, 9.0)
    out1 = jax.block_until_ready(sudoku_agent_forward(x1, prepared))
    ref1 = reference_forward_bf16(x1, params)
    assert out1.shape == (8, ACTION_DIM)
    assert jnp.allclose(out1, ref1, atol=2e-3, rtol=2e-3)

    # Case 2: ragged batch with multi-tile grid (exercises batch tiling + padding).
    x2 = jax.random.uniform(kx2, (200, INPUT_DIM), jnp.float32, 0.0, 9.0)
    out2 = jax.block_until_ready(sudoku_agent_forward(x2, prepared, block_b=64))
    ref2 = reference_forward_bf16(x2, params)
    assert out2.shape == (200, ACTION_DIM)
    assert jnp.allclose(out2, ref2, atol=2e-3, rtol=2e-3)

    print("KERNEL_OK")
</pallas_src>

<mosaic_0001>
module attributes {stable_mosaic.version = 11 : i64} {
  func.func @mlp_kernel(%arg0: i32, %arg1: memref<8x128xbf16, #tpu.memory_space<vmem>>, %arg2: memref<128x128xbf16, #tpu.memory_space<vmem>>, %arg3: memref<1x128xf32, #tpu.memory_space<vmem>>, %arg4: memref<128x128xbf16, #tpu.memory_space<vmem>>, %arg5: memref<1x128xf32, #tpu.memory_space<vmem>>, %arg6: memref<128x768xbf16, #tpu.memory_space<vmem>>, %arg7: memref<1x768xf32, #tpu.memory_space<vmem>>, %arg8: memref<8x768xf32, #tpu.memory_space<vmem>>) attributes {dimension_semantics = [#tpu.dimension_semantics<parallel>], iteration_bounds = array<i64: 1>, scalar_prefetch = 0 : i64, scratch_operands = 0 : i64, tpu.core_type = #tpu.core_type<tc>, window_params = [{transform_indices = @transform_0, window_bounds = array<i64: 8, 128>}, {pipeline_mode = #tpu.pipeline_mode<synchronous>, transform_indices = @transform_1, window_bounds = array<i64: 128, 128>}, {pipeline_mode = #tpu.pipeline_mode<synchronous>, transform_indices = @transform_2, window_bounds = array<i64: 1, 128>}, {pipeline_mode = #tpu.pipeline_mode<synchronous>, transform_indices = @transform_3, window_bounds = array<i64: 128, 128>}, {pipeline_mode = #tpu.pipeline_mode<synchronous>, transform_indices = @transform_4, window_bounds = array<i64: 1, 128>}, {pipeline_mode = #tpu.pipeline_mode<synchronous>, transform_indices = @transform_5, window_bounds = array<i64: 128, 768>}, {pipeline_mode = #tpu.pipeline_mode<synchronous>, transform_indices = @transform_6, window_bounds = array<i64: 1, 768>}, {transform_indices = @transform_7, window_bounds = array<i64: 8, 768>}]} {
    %c0 = arith.constant 0 : index
    %c0_0 = arith.constant 0 : index
    %0 = vector.load %arg1[%c0, %c0_0] : memref<8x128xbf16, #tpu.memory_space<vmem>>, vector<8x128xbf16>
    %c0_1 = arith.constant 0 : index
    %c0_2 = arith.constant 0 : index
    %1 = vector.load %arg2[%c0_1, %c0_2] : memref<128x128xbf16, #tpu.memory_space<vmem>>, vector<128x128xbf16>
    %cst = arith.constant dense<0.000000e+00> : vector<8x128xf32>
    %2 = tpu.matmul %0, %1, %cst {dimension_numbers = #tpu.dot_dimension_numbers<[1], [0], [0], [1], [0, 0, 1, 1], [], []>} : vector<8x128xbf16>, vector<128x128xbf16>, vector<8x128xf32> -> vector<8x128xf32>
    %c0_3 = arith.constant 0 : index
    %c0_4 = arith.constant 0 : index
    %3 = vector.load %arg3[%c0_3, %c0_4] : memref<1x128xf32, #tpu.memory_space<vmem>>, vector<1x128xf32>
    %4 = vector.broadcast %3 : vector<1x128xf32> to vector<8x128xf32>
    %5 = arith.addf %2, %4 : vector<8x128xf32>
    %cst_5 = arith.constant 0.000000e+00 : f32
    %6 = vector.broadcast %cst_5 : f32 to vector<8x128xf32>
    %7 = arith.maximumf %5, %6 : vector<8x128xf32>
    %8 = arith.truncf %7 : vector<8x128xf32> to vector<8x128xbf16>
    %c0_6 = arith.constant 0 : index
    %c0_7 = arith.constant 0 : index
    %9 = vector.load %arg4[%c0_6, %c0_7] : memref<128x128xbf16, #tpu.memory_space<vmem>>, vector<128x128xbf16>
    %cst_8 = arith.constant dense<0.000000e+00> : vector<8x128xf32>
    %10 = tpu.matmul %8, %9, %cst_8 {dimension_numbers = #tpu.dot_dimension_numbers<[1], [0], [0], [1], [0, 0, 1, 1], [], []>} : vector<8x128xbf16>, vector<128x128xbf16>, vector<8x128xf32> -> vector<8x128xf32>
    %c0_9 = arith.constant 0 : index
    %c0_10 = arith.constant 0 : index
    %11 = vector.load %arg5[%c0_9, %c0_10] : memref<1x128xf32, #tpu.memory_space<vmem>>, vector<1x128xf32>
    %12 = vector.broadcast %11 : vector<1x128xf32> to vector<8x128xf32>
    %13 = arith.addf %10, %12 : vector<8x128xf32>
    %cst_11 = arith.constant 0.000000e+00 : f32
    %14 = vector.broadcast %cst_11 : f32 to vector<8x128xf32>
    %15 = arith.maximumf %13, %14 : vector<8x128xf32>
    %16 = arith.truncf %15 : vector<8x128xf32> to vector<8x128xbf16>
    %c0_12 = arith.constant 0 : index
    %c0_13 = arith.constant 0 : index
    %17 = vector.load %arg6[%c0_12, %c0_13] : memref<128x768xbf16, #tpu.memory_space<vmem>>, vector<128x768xbf16>
    %cst_14 = arith.constant dense<0.000000e+00> : vector<8x768xf32>
    %18 = tpu.matmul %16, %17, %cst_14 {dimension_numbers = #tpu.dot_dimension_numbers<[1], [0], [0], [1], [0, 0, 1, 1], [], []>} : vector<8x128xbf16>, vector<128x768xbf16>, vector<8x768xf32> -> vector<8x768xf32>
    %c0_15 = arith.constant 0 : index
    %c0_16 = arith.constant 0 : index
    %19 = vector.load %arg7[%c0_15, %c0_16] : memref<1x768xf32, #tpu.memory_space<vmem>>, vector<1x768xf32>
    %20 = vector.broadcast %19 : vector<1x768xf32> to vector<8x768xf32>
    %21 = arith.addf %18, %20 : vector<8x768xf32>
    %c0_17 = arith.constant 0 : index
    %c0_18 = arith.constant 0 : index
    %22 = vector.load %arg8[%c0_17, %c0_18] : memref<8x768xf32, #tpu.memory_space<vmem>>, vector<8x768xf32>
    tpu.vector_store %arg8[%c0_17, %c0_18], %21 {strides = array<i32>} : memref<8x768xf32, #tpu.memory_space<vmem>>, vector<8x768xf32>,
    return
  }
  func.func @transform_0(%arg0: i32) -> (i32, i32) {
    %c0_i32 = arith.constant 0 : i32
    %c0_i32_0 = arith.constant 0 : i32
    return %arg0, %c0_i32 : i32, i32
  }
  func.func @transform_1(%arg0: i32) -> (i32, i32) {
    %c0_i32 = arith.constant 0 : i32
    %c0_i32_0 = arith.constant 0 : i32
    %c0_i32_1 = arith.constant 0 : i32
    return %c0_i32, %c0_i32_0 : i32, i32
  }
  func.func @transform_2(%arg0: i32) -> (i32, i32) {
    %c0_i32 = arith.constant 0 : i32
    %c0_i32_0 = arith.constant 0 : i32
    %c0_i32_1 = arith.constant 0 : i32
    return %c0_i32, %c0_i32_0 : i32, i32
  }
  func.func @transform_3(%arg0: i32) -> (i32, i32) {
    %c0_i32 = arith.constant 0 : i32
    %c0_i32_0 = arith.constant 0 : i32
    %c0_i32_1 = arith.constant 0 : i32
    return %c0_i32, %c0_i32_0 : i32, i32
  }
  func.func @transform_4(%arg0: i32) -> (i32, i32) {
    %c0_i32 = arith.constant 0 : i32
    %c0_i32_0 = arith.constant 0 : i32
    %c0_i32_1 = arith.constant 0 : i32
    return %c0_i32, %c0_i32_0 : i32, i32
  }
  func.func @transform_5(%arg0: i32) -> (i32, i32) {
    %c0_i32 = arith.constant 0 : i32
    %c0_i32_0 = arith.constant 0 : i32
    %c0_i32_1 = arith.constant 0 : i32
    return %c0_i32, %c0_i32_0 : i32, i32
  }
  func.func @transform_6(%arg0: i32) -> (i32, i32) {
    %c0_i32 = arith.constant 0 : i32
    %c0_i32_0 = arith.constant 0 : i32
    %c0_i32_1 = arith.constant 0 : i32
    return %c0_i32, %c0_i32_0 : i32, i32
  }
  func.func @transform_7(%arg0: i32) -> (i32, i32) {
    %c0_i32 = arith.constant 0 : i32
    %c0_i32_0 = arith.constant 0 : i32
    return %arg0, %c0_i32 : i32, i32
  }
}

</mosaic_0001>

<llo_original>
// kernel: tpu_custom_call.1
$region0: #{tpu_custom_call.1}
  #allocation0 [shape = 'u32[]', space=smem, size = 0x4, offset = 0x4, fixed_abs, tag = 'smem constant byte address 0x4 - core index']
  #allocation1 [shape = 'u32[144,128]{1,0:T(1,128)}', space=vmem, size = 0x12000, scoped, tag = 'internal scratch']
  %s0 = inlined_call_operand.hbm [shape: bf16[8,128], index: 0, kind: input, shape index: {}]
  %s1 = inlined_call_operand.hbm [shape: bf16[128,128], index: 1, kind: input, shape index: {}]
  %s2 = inlined_call_operand.vmem [shape: f32[1,128], index: 2, kind: input, shape index: {}]
  %s3 = inlined_call_operand.hbm [shape: bf16[128,128], index: 3, kind: input, shape index: {}]
  %s4 = inlined_call_operand.vmem [shape: f32[1,128], index: 4, kind: input, shape index: {}]
  %s5 = inlined_call_operand.hbm [shape: bf16[128,768], index: 5, kind: input, shape index: {}]
  %s6 = inlined_call_operand.vmem [shape: f32[1,768], index: 6, kind: input, shape index: {}]
  %s7 = inlined_call_operand.hbm [shape: f32[8,768], index: 7, kind: output, shape index: {}]
  %s8 = sld [smem:[#allocation0]]
  $region54: #{tpu_custom_call.1} parent=0
    _
  %s10 = ssub.s32 1, %s8
  %s11 = scalar_select 0, %s10, %s8
  $region1: #{tpu_custom_call.1} parent=0
    #allocation2 [shape = 'u8[2048]{0}', space=vmem, size = 0x800, scoped, tag = 'input window, operand 0, single buffered']
    #allocation3 [shape = 's32[1]{0}', space=sflag, size = 0x4, scoped, tag = 'scoped memory for tpu_custom_call.1']
    #allocation4 [shape = 's32[1]{0}', space=sflag, size = 0x4, scoped, tag = 'scoped memory for tpu_custom_call.1']
    #allocation5 [shape = 'u8[32768]{0}', space=vmem, size = 0x8000, scoped, tag = 'input window, operand 1, single buffered']
    #allocation6 [shape = 's32[1]{0}', space=sflag, size = 0x4, scoped, tag = 'scoped memory for tpu_custom_call.1']
    #allocation7 [shape = 'u8[32768]{0}', space=vmem, size = 0x8000, scoped, tag = 'input window, operand 3, single buffered']
    #allocation8 [shape = 'u8[196608]{0}', space=vmem, size = 0x30000, scoped, tag = 'input window, operand 5, single buffered']
    #allocation9 [shape = 's32[1]{0}', space=sflag, size = 0x4, scoped, tag = 'scoped memory for tpu_custom_call.1']
    #allocation10 [shape = 'u8[24576]{0}', space=vmem, size = 0x6000, scoped, tag = 'output window, operand 0, single buffered']
    %12 = vsyncpa [#allocation3], 0
    %13 = vsyncpa [#allocation6], 0
    %14 = vsyncpa [#allocation9], 0
    %15 = vsyncpa [#allocation4], 0
    // Predicated region
    $region2: #{tpu_custom_call.1} parent=1 // pred_check
      _
    $region3: #{tpu_custom_call.1} parent=1 // pred_check_branch
      %17 = sbr.rel (0) target = $region5
    $region4: #{tpu_custom_call.1} parent=1 // pred_region
      %s19 = ssub.s32 64, 64
      %20 = vsyncadd [#allocation3], %s19
      %s22 = sshll.u32 [#allocation2], 4
      %s23 = int_to_ptr.vmem [resolvable:$true] %s22
      %25 = dma.hbm_to_vmem [thread:$0]  %s0, 64, %s23, [#allocation3]
    $region5: #{tpu_custom_call.1} parent=1 // pred_fallthru
      _
    // Predicated region
    $region6: #{tpu_custom_call.1} parent=1 // pred_check
      _
    $region7: #{tpu_custom_call.1} parent=1 // pred_check_branch
      %27 = sbr.rel (0) target = $region9
    $region8: #{tpu_custom_call.1} parent=1 // pred_region
      %s29 = ssub.s32 1024, 1024
      %30 = vsyncadd [#allocation6], %s29
      %s31 = sshll.u32 [#allocation5], 4
      %s32 = int_to_ptr.vmem [resolvable:$true] %s31
      %37 = dma.hbm_to_vmem [thread:$0]  %s1, 1024, %s32, [#allocation6], 64, 64, 4
    $region9: #{tpu_custom_call.1} parent=1 // pred_fallthru
      _
    // Predicated region
    $region10: #{tpu_custom_call.1} parent=1 // pred_check
      _
    $region11: #{tpu_custom_call.1} parent=1 // pred_check_branch
      %39 = sbr.rel (0) target = $region13
    $region12: #{tpu_custom_call.1} parent=1 // pred_region
      _
    $region13: #{tpu_custom_call.1} parent=1 // pred_fallthru
      _
    // Predicated region
    $region14: #{tpu_custom_call.1} parent=1 // pred_check
      _
    $region15: #{tpu_custom_call.1} parent=1 // pred_check_branch
      %41 = sbr.rel (0) target = $region17
    $region16: #{tpu_custom_call.1} parent=1 // pred_region
      %s43 = ssub.s32 1024, 1024
      %44 = vsyncadd [#allocation6], %s43
      %s45 = sshll.u32 [#allocation7], 4
      %s46 = int_to_ptr.vmem [resolvable:$true] %s45
      %51 = dma.hbm_to_vmem [thread:$0]  %s3, 1024, %s46, [#allocation6], 64, 64, 4
    $region17: #{tpu_custom_call.1} parent=1 // pred_fallthru
      _
    // Predicated region
    $region18: #{tpu_custom_call.1} parent=1 // pred_check
      _
    $region19: #{tpu_custom_call.1} parent=1 // pred_check_branch
      %53 = sbr.rel (0) target = $region21
    $region20: #{tpu_custom_call.1} parent=1 // pred_region
      _
    $region21: #{tpu_custom_call.1} parent=1 // pred_fallthru
      _
    // Predicated region
    $region22: #{tpu_custom_call.1} parent=1 // pred_check
      _
    $region23: #{tpu_custom_call.1} parent=1 // pred_check_branch
      %55 = sbr.rel (0) target = $region25
    $region24: #{tpu_custom_call.1} parent=1 // pred_region
      %s57 = ssub.s32 6144, 6144
      %58 = vsyncadd [#allocation9], %s57
      %s59 = sshll.u32 [#allocation8], 4
      %s60 = int_to_ptr.vmem [resolvable:$true] %s59
      %65 = dma.hbm_to_vmem [thread:$0]  %s5, 6144, %s60, [#allocation9], 384, 384, 24
    $region25: #{tpu_custom_call.1} parent=1 // pred_fallthru
      _
    // Predicated region
    $region26: #{tpu_custom_call.1} parent=1 // pred_check
      _
    $region27: #{tpu_custom_call.1} parent=1 // pred_check_branch
      %67 = sbr.rel (0) target = $region29
    $region28: #{tpu_custom_call.1} parent=1 // pred_region
      _
    $region29: #{tpu_custom_call.1} parent=1 // pred_fallthru
      _
    // Predicated region
    $region30: #{tpu_custom_call.1} parent=1 // pred_check
      _
    $region31: #{tpu_custom_call.1} parent=1 // pred_check_branch
      %69 = sbr.rel (0) target = $region33
    $region32: #{tpu_custom_call.1} parent=1 // pred_region
      %70 = dma.done [#allocation3], 64
    $region33: #{tpu_custom_call.1} parent=1 // pred_fallthru
      _
    // Predicated region
    $region34: #{tpu_custom_call.1} parent=1 // pred_check
      _
    $region35: #{tpu_custom_call.1} parent=1 // pred_check_branch
      %72 = sbr.rel (0) target = $region37
    $region36: #{tpu_custom_call.1} parent=1 // pred_region
      %73 = dma.done [#allocation6], 1024
    $region37: #{tpu_custom_call.1} parent=1 // pred_fallthru
      _
    // Predicated region
    $region38: #{tpu_custom_call.1} parent=1 // pred_check
      _
    $region39: #{tpu_custom_call.1} parent=1 // pred_check_branch
      %75 = sbr.rel (0) target = $region41
    $region40: #{tpu_custom_call.1} parent=1 // pred_region
      %76 = dma.done [#allocation6], 1024
    $region41: #{tpu_custom_call.1} parent=1 // pred_fallthru
      _
    // Predicated region
    $region42: #{tpu_custom_call.1} parent=1 // pred_check
      _
    $region43: #{tpu_custom_call.1} parent=1 // pred_check_branch
      %78 = sbr.rel (0) target = $region45
    $region44: #{tpu_custom_call.1} parent=1 // pred_region
      %79 = dma.done [#allocation9], 6144
    $region45: #{tpu_custom_call.1} parent=1 // pred_fallthru
      _
    %v81 = vld [vmem:[#allocation2] sm:$0xf]
    %v82 = vld [vmem:[#allocation5] sm:$0xf]
    %v83 = vld [vmem:[#allocation5 + $0x4] sm:$0xf]
    %v84 = vld [vmem:[#allocation5 + $0x8] sm:$0xf]
    %v85 = vld [vmem:[#allocation5 + $0xc] sm:$0xf]
    %v86 = vld [vmem:[#allocation5 + $0x10] sm:$0xf]
    %v87 = vld [vmem:[#allocation5 + $0x14] sm:$0xf]
    %v88 = vld [vmem:[#allocation5 + $0x18] sm:$0xf]
    %v89 = vld [vmem:[#allocation5 + $0x1c] sm:$0xf]
    %v90 = vld [vmem:[#allocation5 + $0x20] sm:$0xf]
    %v91 = vld [vmem:[#allocation5 + $0x24] sm:$0xf]
    %v92 = vld [vmem:[#allocation5 + $0x28] sm:$0xf]
    %v93 = vld [vmem:[#allocation5 + $0x2c] sm:$0xf]
    %v94 = vld [vmem:[#allocation5 + $0x30] sm:$0xf]
    %v95 = vld [vmem:[#allocation5 + $0x34] sm:$0xf]
    %v96 = vld [vmem:[#allocation5 + $0x38] sm:$0xf]
    %v97 = vld [vmem:[#allocation5 + $0x3c] sm:$0xf]
    %v98 = vld [vmem:[%s2] sm:$0x1]
    %v100 = vlaneseq
    %v101 = vshrl.u32 %v100, 7
    %v102 = vsub.s32 0, %v101
    %v103 = vrot.slane %v98, %v102
    %v121 = vunpack.c.l.b16 %v82
    %v122 = vunpack.c.l.b16 %v83
    %v123 = vunpack.c.l.b16 %v84
    %v124 = vunpack.c.l.b16 %v85
    %v125 = vunpack.c.l.b16 %v86
    %v126 = vunpack.c.l.b16 %v87
    %v127 = vunpack.c.l.b16 %v88
    %v128 = vunpack.c.l.b16 %v89
    %v129 = vunpack.c.l.b16 %v90
    %v130 = vunpack.c.l.b16 %v91
    %v131 = vunpack.c.l.b16 %v92
    %v132 = vunpack.c.l.b16 %v93
    %v133 = vunpack.c.l.b16 %v94
    %v134 = vunpack.c.l.b16 %v95
    %v135 = vunpack.c.l.b16 %v96
    %v136 = vunpack.c.l.b16 %v97
    %v137 = vpack.c.b16 %v122, %v121
    %v138 = vpack.c.b16 %v124, %v123
    %v139 = vpack.c.b16 %v126, %v125
    %v140 = vpack.c.b16 %v128, %v127
    %v141 = vpack.c.b16 %v130, %v129
    %v142 = vpack.c.b16 %v132, %v131
    %v143 = vpack.c.b16 %v134, %v133
    %v144 = vpack.c.b16 %v136, %v135
    %153 = vmatprep.subr.bf16.mxu0 0
    %154 = vmatpush1.bf16.msra.mxu0 %v137
    %155 = vmatprep.subr.bf16.mxu0 0
    %156 = vmatpush1.bf16.msra.mxu0 %v138
    %157 = vmatprep.subr.bf16.mxu0 0
    %158 = vmatpush1.bf16.msra.mxu0 %v139
    %159 = vmatprep.subr.bf16.mxu0 0
    %160 = vmatpush1.bf16.msra.mxu0 %v140
    %161 = vmatprep.subr.bf16.mxu0 0
    %162 = vmatpush1.bf16.msra.mxu0 %v141
    %163 = vmatprep.subr.bf16.mxu0 0
    %164 = vmatpush1.bf16.msra.mxu0 %v142
    %165 = vmatprep.subr.bf16.mxu0 0
    %166 = vmatpush1.bf16.msra.mxu0 %v143
    %167 = vmatprep.subr.bf16.mxu0 0
    %168 = vmatpush1.bf16.msra.mxu0 %v144
    %169 = vmatprep.subr.bf16.mxu0 0
    %170 = vmatpush1.bf16.msra.mxu0 0
    %171 = vmatprep.subr.bf16.mxu0 0
    %172 = vmatpush1.bf16.msra.mxu0 0
    %173 = vmatprep.subr.bf16.mxu0 0
    %174 = vmatpush1.bf16.msra.mxu0 0
    %175 = vmatprep.subr.bf16.mxu0 0
    %176 = vmatpush1.bf16.msra.mxu0 0
    %177 = vmatprep.subr.bf16.mxu0 0
    %178 = vmatpush1.bf16.msra.mxu0 0
    %179 = vmatprep.subr.bf16.mxu0 0
    %180 = vmatpush1.bf16.msra.mxu0 0
    %181 = vmatprep.subr.bf16.mxu0 0
    %182 = vmatpush1.bf16.msra.mxu0 0
    %183 = vmatprep.subr.bf16.mxu0 0
    %184 = vmatpush1.bf16.msra.mxu0 0
    %185 = vmatprep.mubr.bf16.mxu0 0
    %186 = vmatmul.mubr.bf16.gmra.mrb[0].mxu0 %v81
    %v187 = vpop.f32.mrb[0].mxu0
    %v188 = vadd.f32 %v103, %v187
    %v189 = vpop.f32.mrb[0].mxu0
    %v190 = vpop.f32.mrb[0].mxu0
    %v191 = vpop.f32.mrb[0].mxu0
    %192 = vdwg.mxu0
    %v193 = vmax.f32 %v188, 0.0
    %v194 = vpack.c.bf16 %v193, %v193
    %v195 = vld [vmem:[#allocation7] sm:$0xf]
    %v196 = vld [vmem:[#allocation7 + $0x4] sm:$0xf]
    %v197 = vld [vmem:[#allocation7 + $0x8] sm:$0xf]
    %v198 = vld [vmem:[#allocation7 + $0xc] sm:$0xf]
    %v199 = vld [vmem:[#allocation7 + $0x10] sm:$0xf]
    %v200 = vld [vmem:[#allocation7 + $0x14] sm:$0xf]
    %v201 = vld [vmem:[#allocation7 + $0x18] sm:$0xf]
    %v202 = vld [vmem:[#allocation7 + $0x1c] sm:$0xf]
    %v203 = vld [vmem:[#allocation7 + $0x20] sm:$0xf]
    %v204 = vld [vmem:[#allocation7 + $0x24] sm:$0xf]
    %v205 = vld [vmem:[#allocation7 + $0x28] sm:$0xf]
    %v206 = vld [vmem:[#allocation7 + $0x2c] sm:$0xf]
    %v207 = vld [vmem:[#allocation7 + $0x30] sm:$0xf]
    %v208 = vld [vmem:[#allocation7 + $0x34] sm:$0xf]
    %v209 = vld [vmem:[#allocation7 + $0x38] sm:$0xf]
    %v210 = vld [vmem:[#allocation7 + $0x3c] sm:$0xf]
    %v211 = vld [vmem:[%s4] sm:$0x1]
    %v213 = vlaneseq
    %v214 = vshrl.u32 %v213, 7
    %v215 = vsub.s32 0, %v214
    %v216 = vrot.slane %v211, %v215
    %v234 = vunpack.c.l.b16 %v195
    %v235 = vunpack.c.l.b16 %v196
    %v236 = vunpack.c.l.b16 %v197
    %v237 = vunpack.c.l.b16 %v198
    %v238 = vunpack.c.l.b16 %v199
    %v239 = vunpack.c.l.b16 %v200
    %v240 = vunpack.c.l.b16 %v201
    %v241 = vunpack.c.l.b16 %v202
    %v242 = vunpack.c.l.b16 %v203
    %v243 = vunpack.c.l.b16 %v204
    %v244 = vunpack.c.l.b16 %v205
    %v245 = vunpack.c.l.b16 %v206
    %v246 = vunpack.c.l.b16 %v207
    %v247 = vunpack.c.l.b16 %v208
    %v248 = vunpack.c.l.b16 %v209
    %v249 = vunpack.c.l.b16 %v210
    %v250 = vpack.c.b16 %v235, %v234
    %v251 = vpack.c.b16 %v237, %v236
    %v252 = vpack.c.b16 %v239, %v238
    %v253 = vpack.c.b16 %v241, %v240
    %v254 = vpack.c.b16 %v243, %v242
    %v255 = vpack.c.b16 %v245, %v244
    %v256 = vpack.c.b16 %v247, %v246
    %v257 = vpack.c.b16 %v249, %v248
    %266 = vmatprep.subr.bf16.mxu0 0
    %267 = vmatpush1.bf16.msra.mxu0 %v250
    %268 = vmatprep.subr.bf16.mxu0 0
    %269 = vmatpush1.bf16.msra.mxu0 %v251
    %270 = vmatprep.subr.bf16.mxu0 0
    %271 = vmatpush1.bf16.msra.mxu0 %v252
    %272 = vmatprep.subr.bf16.mxu0 0
    %273 = vmatpush1.bf16.msra.mxu0 %v253
    %274 = vmatprep.subr.bf16.mxu0 0
    %275 = vmatpush1.bf16.msra.mxu0 %v254
    %276 = vmatprep.subr.bf16.mxu0 0
    %277 = vmatpush1.bf16.msra.mxu0 %v255
    %278 = vmatprep.subr.bf16.mxu0 0
    %279 = vmatpush1.bf16.msra.mxu0 %v256
    %280 = vmatprep.subr.bf16.mxu0 0
    %281 = vmatpush1.bf16.msra.mxu0 %v257
    %282 = vmatprep.subr.bf16.mxu0 0
    %283 = vmatpush1.bf16.msra.mxu0 0
    %284 = vmatprep.subr.bf16.mxu0 0
    %285 = vmatpush1.bf16.msra.mxu0 0
    %286 = vmatprep.subr.bf16.mxu0 0
    %287 = vmatpush1.bf16.msra.mxu0 0
    %288 = vmatprep.subr.bf16.mxu0 0
    %289 = vmatpush1.bf16.msra.mxu0 0
    %290 = vmatprep.subr.bf16.mxu0 0
    %291 = vmatpush1.bf16.msra.mxu0 0
    %292 = vmatprep.subr.bf16.mxu0 0
    %293 = vmatpush1.bf16.msra.mxu0 0
    %294 = vmatprep.subr.bf16.mxu0 0
    %295 = vmatpush1.bf16.msra.mxu0 0
    %296 = vmatprep.subr.bf16.mxu0 0
    %297 = vmatpush1.bf16.msra.mxu0 0
    %298 = vmatprep.mubr.bf16.mxu0 0
    %299 = vmatmul.mubr.bf16.gmra.mrb[0].mxu0 %v194
    %v300 = vpop.f32.mrb[0].mxu0
    %v301 = vadd.f32 %v216, %v300
    %v302 = vpop.f32.mrb[0].mxu0
    %v303 = vpop.f32.mrb[0].mxu0
    %v304 = vpop.f32.mrb[0].mxu0
    %305 = vdwg.mxu0
    %v306 = vmax.f32 %v301, 0.0
    %v307 = vpack.c.bf16 %v306, %v306
    %v308 = vld [vmem:[#allocation8] sm:$0xff]
    %v309 = vld [vmem:[#allocation8 + $0x8] sm:$0xff]
    %v310 = vld [vmem:[#allocation8 + $0x10] sm:$0xff]
    %v311 = vld [vmem:[#allocation8 + $0x18] sm:$0xff]
    %v312 = vld [vmem:[#allocation8 + $0x20] sm:$0xff]
    %v313 = vld [vmem:[#allocation8 + $0x28] sm:$0xff]
    %v314 = vld [vmem:[#allocation8 + $0x30] sm:$0xff]
    %v315 = vld [vmem:[#allocation8 + $0x38] sm:$0xff]
    %v316 = vld [vmem:[#allocation8 + $0x40] sm:$0xff]
    %v317 = vld [vmem:[#allocation8 + $0x48] sm:$0xff]
    %v318 = vld [vmem:[#allocation8 + $0x50] sm:$0xff]
    %v319 = vld [vmem:[#allocation8 + $0x58] sm:$0xff]
    %v320 = vld [vmem:[#allocation8 + $0x60] sm:$0xff]
    %v321 = vld [vmem:[#allocation8 + $0x68] sm:$0xff]
    %v322 = vld [vmem:[#allocation8 + $0x70] sm:$0xff]
    %v323 = vld [vmem:[#allocation8 + $0x78] sm:$0xff]
    %v324 = vld [vmem:[#allocation8 + $0x80] sm:$0xff]
    %v325 = vld [vmem:[#allocation8 + $0x88] sm:$0xff]
    %v326 = vld [vmem:[#allocation8 + $0x90] sm:$0xff]
    %v327 = vld [vmem:[#allocation8 + $0x98] sm:$0xff]
    %v328 = vld [vmem:[#allocation8 + $0xa0] sm:$0xff]
    %v329 = vld [vmem:[#allocation8 + $0xa8] sm:$0xff]
    %v330 = vld [vmem:[#allocation8 + $0xb0] sm:$0xff]
    %v331 = vld [vmem:[#allocation8 + $0xb8] sm:$0xff]
    %v332 = vld [vmem:[#allocation8 + $0xc0] sm:$0xff]
    %v333 = vld [vmem:[#allocation8 + $0xc8] sm:$0xff]
    %v334 = vld [vmem:[#allocation8 + $0xd0] sm:$0xff]
    %v335 = vld [vmem:[#allocation8 + $0xd8] sm:$0xff]
    %v336 = vld [vmem:[#allocation8 + $0xe0] sm:$0xff]
    %v337 = vld [vmem:[#allocation8 + $0xe8] sm:$0xff]
    %v338 = vld [vmem:[#allocation8 + $0xf0] sm:$0xff]
    %v339 = vld [vmem:[#allocation8 + $0xf8] sm:$0xff]
    %v340 = vld [vmem:[#allocation8 + $0x100] sm:$0xff]
    %v341 = vld [vmem:[#allocation8 + $0x108] sm:$0xff]
    %v342 = vld [vmem:[#allocation8 + $0x110] sm:$0xff]
    %v343 = vld [vmem:[#allocation8 + $0x118] sm:$0xff]
    %v344 = vld [vmem:[#allocation8 + $0x120] sm:$0xff]
    %v345 = vld [vmem:[#allocation8 + $0x128] sm:$0xff]
    %v346 = vld [vmem:[#allocation8 + $0x130] sm:$0xff]
    %v347 = vld [vmem:[#allocation8 + $0x138] sm:$0xff]
    %v348 = vld [vmem:[#allocation8 + $0x140] sm:$0xff]
    %v349 = vld [vmem:[#allocation8 + $0x148] sm:$0xff]
    %v350 = vld [vmem:[#allocation8 + $0x150] sm:$0xff]
    %v351 = vld [vmem:[#allocation8 + $0x158] sm:$0xff]
    %v352 = vld [vmem:[#allocation8 + $0x160] sm:$0xff]
    %v353 = vld [vmem:[#allocation8 + $0x168] sm:$0xff]
    %v354 = vld [vmem:[#allocation8 + $0x170] sm:$0xff]
    %v355 = vld [vmem:[#allocation8 + $0x178] sm:$0xff]
    %v356 = vld [vmem:[%s6] sm:$0x3f]
    %v358 = vlaneseq
    %v359 = vshrl.u32 %v358, 7
    %v360 = vsub.s32 0, %v359
    %v361 = vrot.slane %v356, %v360
    %v362 = vlaneseq
    %v363 = vshrl.u32 %v362, 7
    %v364 = vsub.s32 1, %v363
    %v365 = vrot.slane %v356, %v364
    %v366 = vlaneseq
    %v367 = vshrl.u32 %v366, 7
    %v368 = vsub.s32 2, %v367
    %v369 = vrot.slane %v356, %v368
    %v370 = vlaneseq
    %v371 = vshrl.u32 %v370, 7
    %v372 = vsub.s32 3, %v371
    %v373 = vrot.slane %v356, %v372
    %v374 = vlaneseq
    %v375 = vshrl.u32 %v374, 7
    %v376 = vsub.s32 4, %v375
    %v377 = vrot.slane %v356, %v376
    %v378 = vlaneseq
    %v379 = vshrl.u32 %v378, 7
    %v380 = vsub.s32 5, %v379
    %v381 = vrot.slane %v356, %v380
    %v436 = vunpack.c.l.b16 %v308
    %v437 = vunpack.c.h.b16 %v308
    %v438 = vunpack.c.l.b16 %v309
    %v439 = vunpack.c.h.b16 %v309
    %v440 = vunpack.c.l.b16 %v310
    %v441 = vunpack.c.h.b16 %v310
    %v442 = vunpack.c.l.b16 %v311
    %v443 = vunpack.c.h.b16 %v311
    %v444 = vunpack.c.l.b16 %v312
    %v445 = vunpack.c.h.b16 %v312
    %v446 = vunpack.c.l.b16 %v313
    %v447 = vunpack.c.h.b16 %v313
    %v448 = vunpack.c.l.b16 %v314
    %v449 = vunpack.c.h.b16 %v314
    %v450 = vunpack.c.l.b16 %v315
    %v451 = vunpack.c.h.b16 %v315
    %v452 = vunpack.c.l.b16 %v316
    %v453 = vunpack.c.h.b16 %v316
    %v454 = vunpack.c.l.b16 %v317
    %v455 = vunpack.c.h.b16 %v317
    %v456 = vunpack.c.l.b16 %v318
    %v457 = vunpack.c.h.b16 %v318
    %v458 = vunpack.c.l.b16 %v319
    %v459 = vunpack.c.h.b16 %v319
    %v460 = vunpack.c.l.b16 %v320
    %v461 = vunpack.c.h.b16 %v320
    %v462 = vunpack.c.l.b16 %v321
    %v463 = vunpack.c.h.b16 %v321
    %v464 = vunpack.c.l.b16 %v322
    %v465 = vunpack.c.h.b16 %v322
    %v466 = vunpack.c.l.b16 %v323
    %v467 = vunpack.c.h.b16 %v323
    %v468 = vunpack.c.l.b16 %v324
    %v469 = vunpack.c.h.b16 %v324
    %v470 = vunpack.c.l.b16 %v325
    %v471 = vunpack.c.h.b16 %v325
    %v472 = vunpack.c.l.b16 %v326
    %v473 = vunpack.c.h.b16 %v326
    %v474 = vunpack.c.l.b16 %v327
    %v475 = vunpack.c.h.b16 %v327
    %v476 = vunpack.c.l.b16 %v328
    %v477 = vunpack.c.h.b16 %v328
    %v478 = vunpack.c.l.b16 %v329
    %v479 = vunpack.c.h.b16 %v329
    %v480 = vunpack.c.l.b16 %v330
    %v481 = vunpack.c.h.b16 %v330
    %v482 = vunpack.c.l.b16 %v331
    %v483 = vunpack.c.h.b16 %v331
    %v484 = vunpack.c.l.b16 %v332
    %v485 = vunpack.c.h.b16 %v332
    %v486 = vunpack.c.l.b16 %v333
    %v487 = vunpack.c.h.b16 %v333
    %v488 = vunpack.c.l.b16 %v334
    %v489 = vunpack.c.h.b16 %v334
    %v490 = vunpack.c.l.b16 %v335
    %v491 = vunpack.c.h.b16 %v335
    %v492 = vunpack.c.l.b16 %v336
    %v493 = vunpack.c.h.b16 %v336
    %v494 = vunpack.c.l.b16 %v337
    %v495 = vunpack.c.h.b16 %v337
    %v496 = vunpack.c.l.b16 %v338
    %v497 = vunpack.c.h.b16 %v338
    %v498 = vunpack.c.l.b16 %v339
    %v499 = vunpack.c.h.b16 %v339
    %v500 = vunpack.c.l.b16 %v340
    %v501 = vunpack.c.h.b16 %v340
    %v502 = vunpack.c.l.b16 %v341
    %v503 = vunpack.c.h.b16 %v341
    %v504 = vunpack.c.l.b16 %v342
    %v505 = vunpack.c.h.b16 %v342
    %v506 = vunpack.c.l.b16 %v343
    %v507 = vunpack.c.h.b16 %v343
    %v508 = vunpack.c.l.b16 %v344
    %v509 = vunpack.c.h.b16 %v344
    %v510 = vunpack.c.l.b16 %v345
    %v511 = vunpack.c.h.b16 %v345
    %v512 = vunpack.c.l.b16 %v346
    %v513 = vunpack.c.h.b16 %v346
    %v514 = vunpack.c.l.b16 %v347
    %v515 = vunpack.c.h.b16 %v347
    %v516 = vunpack.c.l.b16 %v348
    %v517 = vunpack.c.h.b16 %v348
    %v518 = vunpack.c.l.b16 %v349
    %v519 = vunpack.c.h.b16 %v349
    %v520 = vunpack.c.l.b16 %v350
    %v521 = vunpack.c.h.b16 %v350
    %v522 = vunpack.c.l.b16 %v351
    %v523 = vunpack.c.h.b16 %v351
    %v524 = vunpack.c.l.b16 %v352
    %v525 = vunpack.c.h.b16 %v352
    %v526 = vunpack.c.l.b16 %v353
    %v527 = vunpack.c.h.b16 %v353
    %v528 = vunpack.c.l.b16 %v354
    %v529 = vunpack.c.h.b16 %v354
    %v530 = vunpack.c.l.b16 %v355
    %v531 = vunpack.c.h.b16 %v355
    %v532 = vpack.c.b16 %v442, %v436
    %v533 = vpack.c.b16 %v443, %v437
    %v534 = vpack.c.b16 %v444, %v438
    %v535 = vpack.c.b16 %v445, %v439
    %v536 = vpack.c.b16 %v446, %v440
    %v537 = vpack.c.b16 %v447, %v441
    %v538 = vpack.c.b16 %v454, %v448
    %v539 = vpack.c.b16 %v455, %v449
    %v540 = vpack.c.b16 %v456, %v450
    %v541 = vpack.c.b16 %v457, %v451
    %v542 = vpack.c.b16 %v458, %v452
    %v543 = vpack.c.b16 %v459, %v453
    %v544 = vpack.c.b16 %v466, %v460
    %v545 = vpack.c.b16 %v467, %v461
    %v546 = vpack.c.b16 %v468, %v462
    %v547 = vpack.c.b16 %v469, %v463
    %v548 = vpack.c.b16 %v470, %v464
    %v549 = vpack.c.b16 %v471, %v465
    %v550 = vpack.c.b16 %v478, %v472
    %v551 = vpack.c.b16 %v479, %v473
    %v552 = vpack.c.b16 %v480, %v474
    %v553 = vpack.c.b16 %v481, %v475
    %v554 = vpack.c.b16 %v482, %v476
    %v555 = vpack.c.b16 %v483, %v477
    %v556 = vpack.c.b16 %v490, %v484
    %v557 = vpack.c.b16 %v491, %v485
    %v558 = vpack.c.b16 %v492, %v486
    %v559 = vpack.c.b16 %v493, %v487
    %v560 = vpack.c.b16 %v494, %v488
    %v561 = vpack.c.b16 %v495, %v489
    %v562 = vpack.c.b16 %v502, %v496
    %v563 = vpack.c.b16 %v503, %v497
    %v564 = vpack.c.b16 %v504, %v498
    %v565 = vpack.c.b16 %v505, %v499
    %v566 = vpack.c.b16 %v506, %v500
    %v567 = vpack.c.b16 %v507, %v501
    %v568 = vpack.c.b16 %v514, %v508
    %v569 = vpack.c.b16 %v515, %v509
    %v570 = vpack.c.b16 %v516, %v510
    %v571 = vpack.c.b16 %v517, %v511
    %v572 = vpack.c.b16 %v518, %v512
    %v573 = vpack.c.b16 %v519, %v513
    %v574 = vpack.c.b16 %v526, %v520
    %v575 = vpack.c.b16 %v527, %v521
    %v576 = vpack.c.b16 %v528, %v522
    %v577 = vpack.c.b16 %v529, %v523
    %v578 = vpack.c.b16 %v530, %v524
    %v579 = vpack.c.b16 %v531, %v525
    %628 = vmatprep.subr.bf16.mxu0 %v533
    %629 = vmatpush1.bf16.msra.mxu0 %v532
    %630 = vmatprep.subr.bf16.mxu0 %v539
    %631 = vmatpush1.bf16.msra.mxu0 %v538
    %632 = vmatprep.subr.bf16.mxu0 %v545
    %633 = vmatpush1.bf16.msra.mxu0 %v544
    %634 = vmatprep.subr.bf16.mxu0 %v551
    %635 = vmatpush1.bf16.msra.mxu0 %v550
    %636 = vmatprep.subr.bf16.mxu0 %v557
    %637 = vmatpush1.bf16.msra.mxu0 %v556
    %638 = vmatprep.subr.bf16.mxu0 %v563
    %639 = vmatpush1.bf16.msra.mxu0 %v562
    %640 = vmatprep.subr.bf16.mxu0 %v569
    %641 = vmatpush1.bf16.msra.mxu0 %v568
    %642 = vmatprep.subr.bf16.mxu0 %v575
    %643 = vmatpush1.bf16.msra.mxu0 %v574
    %644 = vmatprep.subr.bf16.mxu0 0
    %645 = vmatpush1.bf16.msra.mxu0 0
    %646 = vmatprep.subr.bf16.mxu0 0
    %647 = vmatpush1.bf16.msra.mxu0 0
    %648 = vmatprep.subr.bf16.mxu0 0
    %649 = vmatpush1.bf16.msra.mxu0 0
    %650 = vmatprep.subr.bf16.mxu0 0
    %651 = vmatpush1.bf16.msra.mxu0 0
    %652 = vmatprep.subr.bf16.mxu0 0
    %653 = vmatpush1.bf16.msra.mxu0 0
    %654 = vmatprep.subr.bf16.mxu0 0
    %655 = vmatpush1.bf16.msra.mxu0 0
    %656 = vmatprep.subr.bf16.mxu0 0
    %657 = vmatpush1.bf16.msra.mxu0 0
    %658 = vmatprep.subr.bf16.mxu0 0
    %659 = vmatpush1.bf16.msra.mxu0 0
    %660 = vmatprep.mubr.bf16.mxu0 0
    %661 = vmatmul.mubr.bf16.gmra.mrb[0].mxu0 %v307
    %v662 = vpop.f32.mrb[0].mxu0
    %v663 = vadd.f32 %v361, %v662
    %v664 = vpop.f32.mrb[0].mxu0
    %v665 = vadd.f32 %v365, %v664
    %v666 = vpop.f32.mrb[0].mxu0
    %v667 = vpop.f32.mrb[0].mxu0
    %668 = vdwg.mxu0
    %669 = vmatprep.subr.bf16.mxu0 %v535
    %670 = vmatpush1.bf16.msra.mxu0 %v534
    %671 = vmatprep.subr.bf16.mxu0 %v541
    %672 = vmatpush1.bf16.msra.mxu0 %v540
    %673 = vmatprep.subr.bf16.mxu0 %v547
    %674 = vmatpush1.bf16.msra.mxu0 %v546
    %675 = vmatprep.subr.bf16.mxu0 %v553
    %676 = vmatpush1.bf16.msra.mxu0 %v552
    %677 = vmatprep.subr.bf16.mxu0 %v559
    %678 = vmatpush1.bf16.msra.mxu0 %v558
    %679 = vmatprep.subr.bf16.mxu0 %v565
    %680 = vmatpush1.bf16.msra.mxu0 %v564
    %681 = vmatprep.subr.bf16.mxu0 %v571
    %682 = vmatpush1.bf16.msra.mxu0 %v570
    %683 = vmatprep.subr.bf16.mxu0 %v577
    %684 = vmatpush1.bf16.msra.mxu0 %v576
    %685 = vmatprep.subr.bf16.mxu0 0
    %686 = vmatpush1.bf16.msra.mxu0 0
    %687 = vmatprep.subr.bf16.mxu0 0
    %688 = vmatpush1.bf16.msra.mxu0 0
    %689 = vmatprep.subr.bf16.mxu0 0
    %690 = vmatpush1.bf16.msra.mxu0 0
    %691 = vmatprep.subr.bf16.mxu0 0
    %692 = vmatpush1.bf16.msra.mxu0 0
    %693 = vmatprep.subr.bf16.mxu0 0
    %694 = vmatpush1.bf16.msra.mxu0 0
    %695 = vmatprep.subr.bf16.mxu0 0
    %696 = vmatpush1.bf16.msra.mxu0 0
    %697 = vmatprep.subr.bf16.mxu0 0
    %698 = vmatpush1.bf16.msra.mxu0 0
    %699 = vmatprep.subr.bf16.mxu0 0
    %700 = vmatpush1.bf16.msra.mxu0 0
    %701 = vmatprep.mubr.bf16.mxu0 0
    %702 = vmatmul.mubr.bf16.gmra.mrb[0].mxu0 %v307
    %v703 = vpop.f32.mrb[0].mxu0
    %v704 = vadd.f32 %v369, %v703
    %v705 = vpop.f32.mrb[0].mxu0
    %v706 = vadd.f32 %v373, %v705
    %v707 = vpop.f32.mrb[0].mxu0
    %v708 = vpop.f32.mrb[0].mxu0
    %709 = vdwg.mxu0
    %710 = vmatprep.subr.bf16.mxu0 %v537
    %711 = vmatpush1.bf16.msra.mxu0 %v536
    %712 = vmatprep.subr.bf16.mxu0 %v543
    %713 = vmatpush1.bf16.msra.mxu0 %v542
    %714 = vmatprep.subr.bf16.mxu0 %v549
    %715 = vmatpush1.bf16.msra.mxu0 %v548
    %716 = vmatprep.subr.bf16.mxu0 %v555
    %717 = vmatpush1.bf16.msra.mxu0 %v554
    %718 = vmatprep.subr.bf16.mxu0 %v561
    %719 = vmatpush1.bf16.msra.mxu0 %v560
    %720 = vmatprep.subr.bf16.mxu0 %v567
    %721 = vmatpush1.bf16.msra.mxu0 %v566
    %722 = vmatprep.subr.bf16.mxu0 %v573
    %723 = vmatpush1.bf16.msra.mxu0 %v572
    %724 = vmatprep.subr.bf16.mxu0 %v579
    %725 = vmatpush1.bf16.msra.mxu0 %v578
    %726 = vmatprep.subr.bf16.mxu0 0
    %727 = vmatpush1.bf16.msra.mxu0 0
    %728 = vmatprep.subr.bf16.mxu0 0
    %729 = vmatpush1.bf16.msra.mxu0 0
    %730 = vmatprep.subr.bf16.mxu0 0
    %731 = vmatpush1.bf16.msra.mxu0 0
    %732 = vmatprep.subr.bf16.mxu0 0
    %733 = vmatpush1.bf16.msra.mxu0 0
    %734 = vmatprep.subr.bf16.mxu0 0
    %735 = vmatpush1.bf16.msra.mxu0 0
    %736 = vmatprep.subr.bf16.mxu0 0
    %737 = vmatpush1.bf16.msra.mxu0 0
    %738 = vmatprep.subr.bf16.mxu0 0
    %739 = vmatpush1.bf16.msra.mxu0 0
    %740 = vmatprep.subr.bf16.mxu0 0
    %741 = vmatpush1.bf16.msra.mxu0 0
    %742 = vmatprep.mubr.bf16.mxu0 0
    %743 = vmatmul.mubr.bf16.gmra.mrb[0].mxu0 %v307
    %v744 = vpop.f32.mrb[0].mxu0
    %v745 = vadd.f32 %v377, %v744
    %v746 = vpop.f32.mrb[0].mxu0
    %v747 = vadd.f32 %v381, %v746
    %v748 = vpop.f32.mrb[0].mxu0
    %v749 = vpop.f32.mrb[0].mxu0
    %750 = vdwg.mxu0
    %751 = vst [vmem:[#allocation10] sm:$0xff] %v663
    %752 = vst [vmem:[#allocation10 + $0x8] sm:$0xff] %v665
    %753 = vst [vmem:[#allocation10 + $0x10] sm:$0xff] %v704
    %754 = vst [vmem:[#allocation10 + $0x18] sm:$0xff] %v706
    %755 = vst [vmem:[#allocation10 + $0x20] sm:$0xff] %v745
    %756 = vst [vmem:[#allocation10 + $0x28] sm:$0xff] %v747
    // Predicated region
    $region46: #{tpu_custom_call.1} parent=1 // pred_check
      _
    $region47: #{tpu_custom_call.1} parent=1 // pred_check_branch
      %758 = sbr.rel (0) target = $region49
    $region48: #{tpu_custom_call.1} parent=1 // pred_region
      %s760 = ssub.s32 768, 768
      %761 = vsyncadd [#allocation4], %s760
      %s763 = sshll.u32 [#allocation10], 4
      %s764 = int_to_ptr.vmem [resolvable:$true] %s763
      %766 = dma.vmem_to_hbm [thread:$0]  %s764, 768, %s7, [#allocation4]
    $region49: #{tpu_custom_call.1} parent=1 // pred_fallthru
      _
    // Predicated region
    $region50: #{tpu_custom_call.1} parent=1 // pred_check
      _
    $region51: #{tpu_custom_call.1} parent=1 // pred_check_branch
      %768 = sbr.rel (0) target = $region53
    $region52: #{tpu_custom_call.1} parent=1 // pred_region
      %769 = dma.done [#allocation4], 768
    $region53: #{tpu_custom_call.1} parent=1 // pred_fallthru
      _
    %770 = vsyncpa [#allocation3], 1
    %771 = vsyncpa [#allocation6], 1
    %772 = vsyncpa [#allocation9], 1
    %773 = vsyncpa [#allocation4], 1

</llo_original>
